<compile_context>
chip_gen: v5e
topology: v5e:2x2
jax: 0.10.0
libtpu: 0.0.40
codegen_flags: <defaults>
</compile_context>

<pallas_src>
import functools

import jax
import jax.numpy as jnp
import numpy as np
from jax.experimental import pallas as pl
from jax.experimental.pallas import tpu as pltpu


def rbfdd_kernel(x_ref, mu_t_ref, mu_n2_ref, c_ref, w_ref, y_ref, p_ref):
    # x_ref:     (TN, D)   block of input samples
    # mu_t_ref:  (D, H)    RBF centers, pre-transposed (full)
    # mu_n2_ref: (1, H)    ||Mu_h||^2 (full, precomputed)
    # c_ref:     (1, H)    -0.5 / Sd_h^2 (full, precomputed)
    # w_ref:     (1, H)    fc weight row (full)
    # y_ref:     (TN, 1)   output activations
    # p_ref:     (TN, H)   RBF responses
    x = x_ref[...]

    # ||x_n - Mu_h||^2 = ||x_n||^2 - 2 x_n . Mu_h + ||Mu_h||^2  (MXU hot path)
    xm = jnp.dot(x, mu_t_ref[...], preferred_element_type=jnp.float32)   # (TN, H)
    xx = jnp.sum(x * x, axis=1, keepdims=True)                           # (TN, 1)
    sq_dist = xx - 2.0 * xm + mu_n2_ref[...]                             # (TN, H)
    # Guard against tiny negative values from cancellation when x ~= Mu.
    sq_dist = jnp.maximum(sq_dist, 0.0)

    power = sq_dist * c_ref[...]                                         # (TN, H)
    # clip_power: where(<-100, -100, .), where(>40, 40, .)
    power = jnp.where(power < -100.0, -100.0, power)
    power = jnp.where(power > 40.0, 40.0, power)
    p = jnp.exp(power)
    p_ref[...] = p

    # y = 1.7159 * tanh((2/3) * p @ w) -- K=16, N=1 matmul is wasteful on the
    # MXU; do it as a VPU broadcast-multiply + lane reduction instead.
    z = jnp.sum(p * w_ref[...], axis=1, keepdims=True)                   # (TN, 1)
    y_ref[...] = 1.7159 * jnp.tanh((2.0 / 3.0) * z)


def _round_up(a, b):
    return ((a + b - 1) // b) * b


@functools.partial(jax.jit, static_argnames=("tile_n",))
def rbfdd_forward(x, mu, sd, fc_w, *, tile_n=512):
    """x: (N, D), mu: (H, D), sd: (H,), fc_w: (1, H)  ->  (y: (N,1), p: (N,H))"""
    N, D = x.shape
    H = mu.shape[0]

    x = x.astype(jnp.float32)
    mu = mu.astype(jnp.float32)
    sd = sd.astype(jnp.float32)

    # Grid-invariant per-center quantities, hoisted out of the kernel.
    mu_t = mu.T                                                 # (D, H)
    mu_n2 = jnp.sum(mu * mu, axis=1).reshape(1, H)              # (1, H)
    # NOTE: like the torch module, sd == 0 produces inf here (torch divides by
    # zero); the clip inside the kernel then saturates power exactly as torch
    # does.  Precondition: sd should be non-degenerate.
    c = (-0.5 / (sd * sd)).reshape(1, H)                        # (1, H)
    w_row = fc_w.reshape(1, H).astype(jnp.float32)              # (1, H)

    # Pick the tile: as large as requested, but no bigger than (padded) N, and
    # a multiple of 8 (sublane constraint).  Pad N up to a tile multiple so
    # arbitrary batch sizes work.
    tile = max(8, min(tile_n, _round_up(N, 8)))
    tile = _round_up(tile, 8)
    n_pad = _round_up(N, tile)
    if n_pad != N:
        x = jnp.pad(x, ((0, n_pad - N), (0, 0)))
    grid = (n_pad // tile,)

    cost = pl.CostEstimate(
        flops=2 * n_pad * D * H + 6 * n_pad * H,
        transcendentals=n_pad * H + n_pad,
        bytes_accessed=4 * (n_pad * D + D * H + 3 * H + n_pad * H + n_pad),
    )

    y, p = pl.pallas_call(
        rbfdd_kernel,
        out_shape=(
            jax.ShapeDtypeStruct((n_pad, 1), jnp.float32),
            jax.ShapeDtypeStruct((n_pad, H), jnp.float32),
        ),
        grid_spec=pltpu.PrefetchScalarGridSpec(
            num_scalar_prefetch=0,
            grid=grid,
            in_specs=[
                pl.BlockSpec((tile, D), lambda i: (i, 0)),
                pl.BlockSpec((D, H), lambda i: (0, 0)),
                pl.BlockSpec((1, H), lambda i: (0, 0)),
                pl.BlockSpec((1, H), lambda i: (0, 0)),
                pl.BlockSpec((1, H), lambda i: (0, 0)),
            ],
            out_specs=[
                pl.BlockSpec((tile, 1), lambda i: (i, 0)),
                pl.BlockSpec((tile, H), lambda i: (i, 0)),
            ],
        ),
        compiler_params=pltpu.CompilerParams(
            dimension_semantics=("parallel",),
        ),
        cost_estimate=cost,
    )(x, mu_t, mu_n2, c, w_row)

    if n_pad != N:
        y = y[:N]
        p = p[:N]
    return y, p


def rbfdd_reference(x, mu, sd, fc_w):
    # Mirrors the torch code: a = x - Mu[:, None]; diag(a a^T); etc.
    a = x[None, :, :] - mu[:, None, :]                 # (H, N, D)
    num = jnp.sum(a * a, axis=-1)                      # (H, N)
    power = -0.5 * num / (sd * sd)[:, None]            # (H, N)
    power = jnp.clip(power, -100.0, 40.0)
    p = jnp.exp(power).T                               # (N, H)
    z = p @ fc_w.T                                     # (N, 1)
    y = 1.7159 * jnp.tanh((2.0 / 3.0) * z)
    return y, p


if __name__ == "__main__":
    # Small shapes implied by the module: x is (N, pre_rbfdd_input_dim)
    N, D, H = 128, 64, 16

    key = jax.random.PRNGKey(0)
    kx, kmu, ksd, kw = jax.random.split(key, 4)

    x = jax.random.normal(kx, (N, D), dtype=jnp.float32)
    # Deterministic synthetic parameters (module inits to zeros, which would
    # divide by zero -- use non-degenerate values instead).
    mu = 0.1 * jax.random.normal(kmu, (H, D), dtype=jnp.float32)
    sd = 4.0 + jax.random.uniform(ksd, (H,), dtype=jnp.float32)
    # nn.Linear(H, 1, bias=False) default init: U(-1/sqrt(H), 1/sqrt(H))
    bound = 1.0 / np.sqrt(H)
    fc_w = jax.random.uniform(kw, (1, H), minval=-bound, maxval=bound,
                              dtype=jnp.float32)

    y, p = rbfdd_forward(x, mu, sd, fc_w)
    jax.block_until_ready((y, p))

    y_ref, p_ref = rbfdd_reference(x, mu, sd, fc_w)
    np.testing.assert_allclose(np.asarray(p), np.asarray(p_ref), rtol=1e-4, atol=1e-5)
    np.testing.assert_allclose(np.asarray(y), np.asarray(y_ref), rtol=1e-4, atol=1e-5)

    # Also exercise a ragged batch (not a multiple of the tile) to check the
    # padding path.
    x2 = jax.random.normal(kx, (100, D), dtype=jnp.float32)
    y2, p2 = rbfdd_forward(x2, mu, sd, fc_w)
    jax.block_until_ready((y2, p2))
    y2_ref, p2_ref = rbfdd_reference(x2, mu, sd, fc_w)
    np.testing.assert_allclose(np.asarray(p2), np.asarray(p2_ref), rtol=1e-4, atol=1e-5)
    np.testing.assert_allclose(np.asarray(y2), np.asarray(y2_ref), rtol=1e-4, atol=1e-5)

    print("KERNEL_OK")
</pallas_src>

<mosaic_0001>
module attributes {stable_mosaic.version = 11 : i64} {
  func.func @rbfdd_kernel(%arg0: i32, %arg1: memref<128x64xf32, #tpu.memory_space<vmem>>, %arg2: memref<64x16xf32, #tpu.memory_space<vmem>>, %arg3: memref<1x16xf32, #tpu.memory_space<vmem>>, %arg4: memref<1x16xf32, #tpu.memory_space<vmem>>, %arg5: memref<1x16xf32, #tpu.memory_space<vmem>>, %arg6: memref<128x1xf32, #tpu.memory_space<vmem>>, %arg7: memref<128x16xf32, #tpu.memory_space<vmem>>) attributes {dimension_semantics = [#tpu.dimension_semantics<parallel>], iteration_bounds = array<i64: 1>, scalar_prefetch = 0 : i64, scratch_operands = 0 : i64, tpu.core_type = #tpu.core_type<tc>, window_params = [{transform_indices = @transform_0, window_bounds = array<i64: 128, 64>}, {pipeline_mode = #tpu.pipeline_mode<synchronous>, transform_indices = @transform_1, window_bounds = array<i64: 64, 16>}, {pipeline_mode = #tpu.pipeline_mode<synchronous>, transform_indices = @transform_2, window_bounds = array<i64: 1, 16>}, {pipeline_mode = #tpu.pipeline_mode<synchronous>, transform_indices = @transform_3, window_bounds = array<i64: 1, 16>}, {pipeline_mode = #tpu.pipeline_mode<synchronous>, transform_indices = @transform_4, window_bounds = array<i64: 1, 16>}, {transform_indices = @transform_5, window_bounds = array<i64: 128, 1>}, {transform_indices = @transform_6, window_bounds = array<i64: 128, 16>}]} {
    %c0 = arith.constant 0 : index
    %c0_0 = arith.constant 0 : index
    %0 = vector.load %arg1[%c0, %c0_0] : memref<128x64xf32, #tpu.memory_space<vmem>>, vector<128x64xf32>
    %c0_1 = arith.constant 0 : index
    %c0_2 = arith.constant 0 : index
    %1 = vector.load %arg2[%c0_1, %c0_2] : memref<64x16xf32, #tpu.memory_space<vmem>>, vector<64x16xf32>
    %cst = arith.constant dense<0.000000e+00> : vector<128x16xf32>
    %2 = tpu.matmul %0, %1, %cst {dimension_numbers = #tpu.dot_dimension_numbers<[1], [0], [0], [1], [0, 0, 1, 1], [], []>} : vector<128x64xf32>, vector<64x16xf32>, vector<128x16xf32> -> vector<128x16xf32>
    %3 = arith.mulf %0, %0 : vector<128x64xf32>
    %cst_3 = arith.constant dense<0.000000e+00> : vector<128xf32>
    %4 = vector.multi_reduction <add>, %3, %cst_3 [1] : vector<128x64xf32> to vector<128xf32>
    %5 = vector.shape_cast %4 : vector<128xf32> to vector<128x1xf32>
    %cst_4 = arith.constant 2.000000e+00 : f32
    %6 = vector.broadcast %cst_4 : f32 to vector<128x16xf32>
    %7 = arith.mulf %6, %2 : vector<128x16xf32>
    %8 = vector.broadcast %5 : vector<128x1xf32> to vector<128x16xf32>
    %9 = arith.subf %8, %7 : vector<128x16xf32>
    %c0_5 = arith.constant 0 : index
    %c0_6 = arith.constant 0 : index
    %10 = vector.load %arg3[%c0_5, %c0_6] : memref<1x16xf32, #tpu.memory_space<vmem>>, vector<1x16xf32>
    %11 = vector.broadcast %10 : vector<1x16xf32> to vector<128x16xf32>
    %12 = arith.addf %9, %11 : vector<128x16xf32>
    %cst_7 = arith.constant 0.000000e+00 : f32
    %13 = vector.broadcast %cst_7 : f32 to vector<128x16xf32>
    %14 = arith.maximumf %12, %13 : vector<128x16xf32>
    %c0_8 = arith.constant 0 : index
    %c0_9 = arith.constant 0 : index
    %15 = vector.load %arg4[%c0_8, %c0_9] : memref<1x16xf32, #tpu.memory_space<vmem>>, vector<1x16xf32>
    %16 = vector.broadcast %15 : vector<1x16xf32> to vector<128x16xf32>
    %17 = arith.mulf %14, %16 : vector<128x16xf32>
    %cst_10 = arith.constant -1.000000e+02 : f32
    %18 = vector.broadcast %cst_10 : f32 to vector<128x16xf32>
    %19 = arith.cmpf olt, %17, %18 : vector<128x16xf32>
    %cst_11 = arith.constant -1.000000e+02 : f32
    %20 = vector.broadcast %cst_11 : f32 to vector<128x16xf32>
    %21 = arith.select %19, %20, %17 : vector<128x16xi1>, vector<128x16xf32>
    %cst_12 = arith.constant 4.000000e+01 : f32
    %22 = vector.broadcast %cst_12 : f32 to vector<128x16xf32>
    %23 = arith.cmpf ogt, %21, %22 : vector<128x16xf32>
    %cst_13 = arith.constant 4.000000e+01 : f32
    %24 = vector.broadcast %cst_13 : f32 to vector<128x16xf32>
    %25 = arith.select %23, %24, %21 : vector<128x16xi1>, vector<128x16xf32>
    %26 = math.exp %25 : vector<128x16xf32>
    %c0_14 = arith.constant 0 : index
    %c0_15 = arith.constant 0 : index
    %27 = vector.load %arg7[%c0_14, %c0_15] : memref<128x16xf32, #tpu.memory_space<vmem>>, vector<128x16xf32>
    tpu.vector_store %arg7[%c0_14, %c0_15], %26 {strides = array<i32>} : memref<128x16xf32, #tpu.memory_space<vmem>>, vector<128x16xf32>,
    %c0_16 = arith.constant 0 : index
    %c0_17 = arith.constant 0 : index
    %28 = vector.load %arg5[%c0_16, %c0_17] : memref<1x16xf32, #tpu.memory_space<vmem>>, vector<1x16xf32>
    %29 = vector.broadcast %28 : vector<1x16xf32> to vector<128x16xf32>
    %30 = arith.mulf %26, %29 : vector<128x16xf32>
    %cst_18 = arith.constant dense<0.000000e+00> : vector<128xf32>
    %31 = vector.multi_reduction <add>, %30, %cst_18 [1] : vector<128x16xf32> to vector<128xf32>
    %32 = vector.shape_cast %31 : vector<128xf32> to vector<128x1xf32>
    %cst_19 = arith.constant 0.666666686 : f32
    %33 = vector.broadcast %cst_19 : f32 to vector<128x1xf32>
    %34 = arith.mulf %33, %32 : vector<128x1xf32>
    %35 = math.tanh %34 : vector<128x1xf32>
    %cst_20 = arith.constant 1.715900e+00 : f32
    %36 = vector.broadcast %cst_20 : f32 to vector<128x1xf32>
    %37 = arith.mulf %36, %35 : vector<128x1xf32>
    %c0_21 = arith.constant 0 : index
    %c0_22 = arith.constant 0 : index
    %38 = vector.load %arg6[%c0_21, %c0_22] : memref<128x1xf32, #tpu.memory_space<vmem>>, vector<128x1xf32>
    tpu.vector_store %arg6[%c0_21, %c0_22], %37 {strides = array<i32>} : memref<128x1xf32, #tpu.memory_space<vmem>>, vector<128x1xf32>,
    return
  }
  func.func @transform_0(%arg0: i32) -> (i32, i32) {
    %c0_i32 = arith.constant 0 : i32
    %c0_i32_0 = arith.constant 0 : i32
    return %arg0, %c0_i32 : i32, i32
  }
  func.func @transform_1(%arg0: i32) -> (i32, i32) {
    %c0_i32 = arith.constant 0 : i32
    %c0_i32_0 = arith.constant 0 : i32
    %c0_i32_1 = arith.constant 0 : i32
    return %c0_i32, %c0_i32_0 : i32, i32
  }
  func.func @transform_2(%arg0: i32) -> (i32, i32) {
    %c0_i32 = arith.constant 0 : i32
    %c0_i32_0 = arith.constant 0 : i32
    %c0_i32_1 = arith.constant 0 : i32
    return %c0_i32, %c0_i32_0 : i32, i32
  }
  func.func @transform_3(%arg0: i32) -> (i32, i32) {
    %c0_i32 = arith.constant 0 : i32
    %c0_i32_0 = arith.constant 0 : i32
    %c0_i32_1 = arith.constant 0 : i32
    return %c0_i32, %c0_i32_0 : i32, i32
  }
  func.func @transform_4(%arg0: i32) -> (i32, i32) {
    %c0_i32 = arith.constant 0 : i32
    %c0_i32_0 = arith.constant 0 : i32
    %c0_i32_1 = arith.constant 0 : i32
    return %c0_i32, %c0_i32_0 : i32, i32
  }
  func.func @transform_5(%arg0: i32) -> (i32, i32) {
    %c0_i32 = arith.constant 0 : i32
    %c0_i32_0 = arith.constant 0 : i32
    return %arg0, %c0_i32 : i32, i32
  }
  func.func @transform_6(%arg0: i32) -> (i32, i32) {
    %c0_i32 = arith.constant 0 : i32
    %c0_i32_0 = arith.constant 0 : i32
    return %arg0, %c0_i32 : i32, i32
  }
}

</mosaic_0001>

<llo_original>
// kernel: rbfdd_forward.1
$region0: #{rbfdd_forward.1}
  #allocation0 [shape = 'u32[]', space=smem, size = 0x4, offset = 0x4, fixed_abs, tag = 'smem constant byte address 0x4 - core index']
  #allocation1 [shape = 'u32[72,128]{1,0:T(1,128)}', space=vmem, size = 0x9000, scoped, tag = 'internal scratch']
  %s0 = inlined_call_operand.vmem [shape: f32[128,64], index: 0, kind: input, shape index: {}]
  %s1 = inlined_call_operand.vmem [shape: f32[64,16], index: 1, kind: input, shape index: {}]
  %s2 = inlined_call_operand.vmem [shape: f32[1,16], index: 2, kind: input, shape index: {}]
  %s3 = inlined_call_operand.vmem [shape: f32[1,16], index: 3, kind: input, shape index: {}]
  %s4 = inlined_call_operand.vmem [shape: f32[1,16], index: 4, kind: input, shape index: {}]
  %s5 = inlined_call_operand.vmem [shape: f32[128,1], index: 5, kind: output, shape index: {0}]
  %s6 = inlined_call_operand.vmem [shape: f32[128,16], index: 6, kind: output, shape index: {1}]
  %7 = xla_tuple %s5, %s6
  %s8 = sld [smem:[#allocation0]]
  $region38: #{rbfdd_forward.1} parent=0
    _
  %s10 = ssub.s32 1, %s8
  %s11 = scalar_select 0, %s10, %s8
  // Predicated region
  $region2: #{rbfdd_forward.1} parent=0 // pred_check
    _
  $region3: #{rbfdd_forward.1} parent=0 // pred_check_branch
    %13 = sbr.rel (0) target = $region5
  $region4: #{rbfdd_forward.1} parent=0 // pred_region
    _
  $region5: #{rbfdd_forward.1} parent=0 // pred_fallthru
    _
  // Predicated region
  $region6: #{rbfdd_forward.1} parent=0 // pred_check
    _
  $region7: #{rbfdd_forward.1} parent=0 // pred_check_branch
    %15 = sbr.rel (0) target = $region9
  $region8: #{rbfdd_forward.1} parent=0 // pred_region
    _
  $region9: #{rbfdd_forward.1} parent=0 // pred_fallthru
    _
  // Predicated region
  $region10: #{rbfdd_forward.1} parent=0 // pred_check
    _
  $region11: #{rbfdd_forward.1} parent=0 // pred_check_branch
    %17 = sbr.rel (0) target = $region13
  $region12: #{rbfdd_forward.1} parent=0 // pred_region
    _
  $region13: #{rbfdd_forward.1} parent=0 // pred_fallthru
    _
  // Predicated region
  $region14: #{rbfdd_forward.1} parent=0 // pred_check
    _
  $region15: #{rbfdd_forward.1} parent=0 // pred_check_branch
    %19 = sbr.rel (0) target = $region17
  $region16: #{rbfdd_forward.1} parent=0 // pred_region
    _
  $region17: #{rbfdd_forward.1} parent=0 // pred_fallthru
    _
  // Predicated region
  $region18: #{rbfdd_forward.1} parent=0 // pred_check
    _
  $region19: #{rbfdd_forward.1} parent=0 // pred_check_branch
    %21 = sbr.rel (0) target = $region21
  $region20: #{rbfdd_forward.1} parent=0 // pred_region
    _
  $region21: #{rbfdd_forward.1} parent=0 // pred_fallthru
    _
  %v22 = vld [vmem:[%s0] sm:$0xff]
  %v23 = vld [vmem:[%s0 + $0x8] sm:$0xff]
  %v24 = vld [vmem:[%s0 + $0x10] sm:$0xff]
  %v25 = vld [vmem:[%s0 + $0x18] sm:$0xff]
  %v26 = vld [vmem:[%s0 + $0x20] sm:$0xff]
  %v27 = vld [vmem:[%s0 + $0x28] sm:$0xff]
  %v28 = vld [vmem:[%s0 + $0x30] sm:$0xff]
  %v29 = vld [vmem:[%s0 + $0x38] sm:$0xff]
  %v30 = vld [vmem:[%s0 + $0x40] sm:$0xff]
  %v31 = vld [vmem:[%s0 + $0x48] sm:$0xff]
  %v32 = vld [vmem:[%s0 + $0x50] sm:$0xff]
  %v33 = vld [vmem:[%s0 + $0x58] sm:$0xff]
  %v34 = vld [vmem:[%s0 + $0x60] sm:$0xff]
  %v35 = vld [vmem:[%s0 + $0x68] sm:$0xff]
  %v36 = vld [vmem:[%s0 + $0x70] sm:$0xff]
  %v37 = vld [vmem:[%s0 + $0x78] sm:$0xff]
  %v38 = vld [vmem:[%s1] sm:$0xff]
  %v39 = vld [vmem:[%s1 + $0x8] sm:$0xff]
  %v40 = vld [vmem:[%s1 + $0x10] sm:$0xff]
  %v41 = vld [vmem:[%s1 + $0x18] sm:$0xff]
  %v42 = vld [vmem:[%s1 + $0x20] sm:$0xff]
  %v43 = vld [vmem:[%s1 + $0x28] sm:$0xff]
  %v44 = vld [vmem:[%s1 + $0x30] sm:$0xff]
  %v45 = vld [vmem:[%s1 + $0x38] sm:$0xff]
  %vm46 = vcmask 523264
  %v48 = vsel %vm46, %v22, 0
  %v51 = vsel %vm46, %v23, 0
  %v54 = vsel %vm46, %v24, 0
  %v57 = vsel %vm46, %v25, 0
  %v60 = vsel %vm46, %v26, 0
  %v63 = vsel %vm46, %v27, 0
  %v66 = vsel %vm46, %v28, 0
  %v69 = vsel %vm46, %v29, 0
  %v72 = vsel %vm46, %v30, 0
  %v75 = vsel %vm46, %v31, 0
  %v78 = vsel %vm46, %v32, 0
  %v81 = vsel %vm46, %v33, 0
  %v84 = vsel %vm46, %v34, 0
  %v87 = vsel %vm46, %v35, 0
  %v90 = vsel %vm46, %v36, 0
  %v93 = vsel %vm46, %v37, 0
  %95 = vmatpush.msra.mxu0 0.0
  %96 = vmatpush.msra.mxu0 0.0
  %97 = vmatpush.msra.mxu0 0.0
  %98 = vmatpush.msra.mxu0 0.0
  %99 = vmatpush.msra.mxu0 0.0
  %100 = vmatpush.msra.mxu0 0.0
  %101 = vmatpush.msra.mxu0 0.0
  %102 = vmatpush.msra.mxu0 0.0
  %103 = vmatpush.msra.mxu0 %v45
  %104 = vmatpush.msra.mxu0 %v44
  %105 = vmatpush.msra.mxu0 %v43
  %106 = vmatpush.msra.mxu0 %v42
  %107 = vmatpush.msra.mxu0 %v41
  %108 = vmatpush.msra.mxu0 %v40
  %109 = vmatpush.msra.mxu0 %v39
  %110 = vmatpush.msra.mxu0 %v38
  %111 = vmatmul.f32.gmra.mxu0 %v48
  %v112 = vpop.f32.mrf.mxu0
  %v113 = vadd.f32 0.0, %v112
  %114 = vmatmul.f32.gmra.mxu0 %v51
  %v115 = vpop.f32.mrf.mxu0
  %v116 = vadd.f32 0.0, %v115
  %117 = vmatmul.f32.gmra.mxu0 %v54
  %v118 = vpop.f32.mrf.mxu0
  %v119 = vadd.f32 0.0, %v118
  %120 = vmatmul.f32.gmra.mxu0 %v57
  %v121 = vpop.f32.mrf.mxu0
  %v122 = vadd.f32 0.0, %v121
  %123 = vmatmul.f32.gmra.mxu0 %v60
  %v124 = vpop.f32.mrf.mxu0
  %v125 = vadd.f32 0.0, %v124
  %126 = vmatmul.f32.gmra.mxu0 %v63
  %v127 = vpop.f32.mrf.mxu0
  %v128 = vadd.f32 0.0, %v127
  %129 = vmatmul.f32.gmra.mxu0 %v66
  %v130 = vpop.f32.mrf.mxu0
  %v131 = vadd.f32 0.0, %v130
  %132 = vmatmul.f32.gmra.mxu0 %v69
  %v133 = vpop.f32.mrf.mxu0
  %v134 = vadd.f32 0.0, %v133
  %135 = vmatmul.f32.gmra.mxu0 %v72
  %v136 = vpop.f32.mrf.mxu0
  %v137 = vadd.f32 0.0, %v136
  %138 = vmatmul.f32.gmra.mxu0 %v75
  %v139 = vpop.f32.mrf.mxu0
  %v140 = vadd.f32 0.0, %v139
  %141 = vmatmul.f32.gmra.mxu0 %v78
  %v142 = vpop.f32.mrf.mxu0
  %v143 = vadd.f32 0.0, %v142
  %144 = vmatmul.f32.gmra.mxu0 %v81
  %v145 = vpop.f32.mrf.mxu0
  %v146 = vadd.f32 0.0, %v145
  %147 = vmatmul.f32.gmra.mxu0 %v84
  %v148 = vpop.f32.mrf.mxu0
  %v149 = vadd.f32 0.0, %v148
  %150 = vmatmul.f32.gmra.mxu0 %v87
  %v151 = vpop.f32.mrf.mxu0
  %v152 = vadd.f32 0.0, %v151
  %153 = vmatmul.f32.gmra.mxu0 %v90
  %v154 = vpop.f32.mrf.mxu0
  %v155 = vadd.f32 0.0, %v154
  %156 = vmatmul.f32.gmra.mxu0 %v93
  %v157 = vpop.f32.mrf.mxu0
  %v158 = vadd.f32 0.0, %v157
  %159 = vdwg.mxu0
  %v160 = vmul.f32 %v22, %v22
  %v161 = vmul.f32 %v23, %v23
  %v162 = vmul.f32 %v24, %v24
  %v163 = vmul.f32 %v25, %v25
  %v164 = vmul.f32 %v26, %v26
  %v165 = vmul.f32 %v27, %v27
  %v166 = vmul.f32 %v28, %v28
  %v167 = vmul.f32 %v29, %v29
  %v168 = vmul.f32 %v30, %v30
  %v169 = vmul.f32 %v31, %v31
  %v170 = vmul.f32 %v32, %v32
  %v171 = vmul.f32 %v33, %v33
  %v172 = vmul.f32 %v34, %v34
  %v173 = vmul.f32 %v35, %v35
  %v174 = vmul.f32 %v36, %v36
  %v175 = vmul.f32 %v37, %v37
  %v176 = vsel %vm46, %v160, 0.0
  %177 = vadd.xlane.f32.xlu0 %v176
  %v178 = vpop.xlane.xlu0 %177
  %v179 = vsel %vm46, %v161, 0.0
  %180 = vadd.xlane.f32.xlu0 %v179
  %v181 = vpop.xlane.xlu0 %180
  %v182 = vsel %vm46, %v162, 0.0
  %183 = vadd.xlane.f32.xlu0 %v182
  %v184 = vpop.xlane.xlu0 %183
  %v185 = vsel %vm46, %v163, 0.0
  %186 = vadd.xlane.f32.xlu0 %v185
  %v187 = vpop.xlane.xlu0 %186
  %v188 = vsel %vm46, %v164, 0.0
  %189 = vadd.xlane.f32.xlu0 %v188
  %v190 = vpop.xlane.xlu0 %189
  %v191 = vsel %vm46, %v165, 0.0
  %192 = vadd.xlane.f32.xlu0 %v191
  %v193 = vpop.xlane.xlu0 %192
  %v194 = vsel %vm46, %v166, 0.0
  %195 = vadd.xlane.f32.xlu0 %v194
  %v196 = vpop.xlane.xlu0 %195
  %v197 = vsel %vm46, %v167, 0.0
  %198 = vadd.xlane.f32.xlu0 %v197
  %v199 = vpop.xlane.xlu0 %198
  %v200 = vsel %vm46, %v168, 0.0
  %201 = vadd.xlane.f32.xlu0 %v200
  %v202 = vpop.xlane.xlu0 %201
  %v203 = vsel %vm46, %v169, 0.0
  %204 = vadd.xlane.f32.xlu0 %v203
  %v205 = vpop.xlane.xlu0 %204
  %v206 = vsel %vm46, %v170, 0.0
  %207 = vadd.xlane.f32.xlu0 %v206
  %v208 = vpop.xlane.xlu0 %207
  %v209 = vsel %vm46, %v171, 0.0
  %210 = vadd.xlane.f32.xlu0 %v209
  %v211 = vpop.xlane.xlu0 %210
  %v212 = vsel %vm46, %v172, 0.0
  %213 = vadd.xlane.f32.xlu0 %v212
  %v214 = vpop.xlane.xlu0 %213
  %v215 = vsel %vm46, %v173, 0.0
  %216 = vadd.xlane.f32.xlu0 %v215
  %v217 = vpop.xlane.xlu0 %216
  %v218 = vsel %vm46, %v174, 0.0
  %219 = vadd.xlane.f32.xlu0 %v218
  %v220 = vpop.xlane.xlu0 %219
  %v221 = vsel %vm46, %v175, 0.0
  %222 = vadd.xlane.f32.xlu0 %v221
  %v223 = vpop.xlane.xlu0 %222
  %v224 = vmul.f32 %v113, 2.0
  %v225 = vmul.f32 %v116, 2.0
  %v226 = vmul.f32 %v119, 2.0
  %v227 = vmul.f32 %v122, 2.0
  %v228 = vmul.f32 %v125, 2.0
  %v229 = vmul.f32 %v128, 2.0
  %v230 = vmul.f32 %v131, 2.0
  %v231 = vmul.f32 %v134, 2.0
  %v232 = vmul.f32 %v137, 2.0
  %v233 = vmul.f32 %v140, 2.0
  %v234 = vmul.f32 %v143, 2.0
  %v235 = vmul.f32 %v146, 2.0
  %v236 = vmul.f32 %v149, 2.0
  %v237 = vmul.f32 %v152, 2.0
  %v238 = vmul.f32 %v155, 2.0
  %v239 = vmul.f32 %v158, 2.0
  %v240 = vsub.f32 %v178, %v224
  %v241 = vsub.f32 %v181, %v225
  %v242 = vsub.f32 %v184, %v226
  %v243 = vsub.f32 %v187, %v227
  %v244 = vsub.f32 %v190, %v228
  %v245 = vsub.f32 %v193, %v229
  %v246 = vsub.f32 %v196, %v230
  %v247 = vsub.f32 %v199, %v231
  %v248 = vsub.f32 %v202, %v232
  %v249 = vsub.f32 %v205, %v233
  %v250 = vsub.f32 %v208, %v234
  %v251 = vsub.f32 %v211, %v235
  %v252 = vsub.f32 %v214, %v236
  %v253 = vsub.f32 %v217, %v237
  %v254 = vsub.f32 %v220, %v238
  %v255 = vsub.f32 %v223, %v239
  %v256 = vld [vmem:[%s2] sm:$0x1]
  %v258 = vperm.slane %v256, 0
  %v260 = vadd.f32 %v240, %v258
  %v261 = vadd.f32 %v241, %v258
  %v262 = vadd.f32 %v242, %v258
  %v263 = vadd.f32 %v243, %v258
  %v264 = vadd.f32 %v244, %v258
  %v265 = vadd.f32 %v245, %v258
  %v266 = vadd.f32 %v246, %v258
  %v267 = vadd.f32 %v247, %v258
  %v268 = vadd.f32 %v248, %v258
  %v269 = vadd.f32 %v249, %v258
  %v270 = vadd.f32 %v250, %v258
  %v271 = vadd.f32 %v251, %v258
  %v272 = vadd.f32 %v252, %v258
  %v273 = vadd.f32 %v253, %v258
  %v274 = vadd.f32 %v254, %v258
  %v275 = vadd.f32 %v255, %v258
  %v276 = vmax.f32 %v260, 0.0
  %v277 = vmax.f32 %v261, 0.0
  %v278 = vmax.f32 %v262, 0.0
  %v279 = vmax.f32 %v263, 0.0
  %v280 = vmax.f32 %v264, 0.0
  %v281 = vmax.f32 %v265, 0.0
  %v282 = vmax.f32 %v266, 0.0
  %v283 = vmax.f32 %v267, 0.0
  %v284 = vmax.f32 %v268, 0.0
  %v285 = vmax.f32 %v269, 0.0
  %v286 = vmax.f32 %v270, 0.0
  %v287 = vmax.f32 %v271, 0.0
  %v288 = vmax.f32 %v272, 0.0
  %v289 = vmax.f32 %v273, 0.0
  %v290 = vmax.f32 %v274, 0.0
  %v291 = vmax.f32 %v275, 0.0
  %v292 = vld [vmem:[%s3] sm:$0x1]
  %v294 = vperm.slane %v292, 0
  %v296 = vmul.f32 %v276, %v294
  %v297 = vmul.f32 %v277, %v294
  %v298 = vmul.f32 %v278, %v294
  %v299 = vmul.f32 %v279, %v294
  %v300 = vmul.f32 %v280, %v294
  %v301 = vmul.f32 %v281, %v294
  %v302 = vmul.f32 %v282, %v294
  %v303 = vmul.f32 %v283, %v294
  %v304 = vmul.f32 %v284, %v294
  %v305 = vmul.f32 %v285, %v294
  %v306 = vmul.f32 %v286, %v294
  %v307 = vmul.f32 %v287, %v294
  %v308 = vmul.f32 %v288, %v294
  %v309 = vmul.f32 %v289, %v294
  %v310 = vmul.f32 %v290, %v294
  %v311 = vmul.f32 %v291, %v294
  %vm312 = vcmp.lt.f32.partialorder %v296, -100.0
  %vm313 = vcmp.lt.f32.partialorder %v297, -100.0
  %vm314 = vcmp.lt.f32.partialorder %v298, -100.0
  %vm315 = vcmp.lt.f32.partialorder %v299, -100.0
  %vm316 = vcmp.lt.f32.partialorder %v300, -100.0
  %vm317 = vcmp.lt.f32.partialorder %v301, -100.0
  %vm318 = vcmp.lt.f32.partialorder %v302, -100.0
  %vm319 = vcmp.lt.f32.partialorder %v303, -100.0
  %vm320 = vcmp.lt.f32.partialorder %v304, -100.0
  %vm321 = vcmp.lt.f32.partialorder %v305, -100.0
  %vm322 = vcmp.lt.f32.partialorder %v306, -100.0
  %vm323 = vcmp.lt.f32.partialorder %v307, -100.0
  %vm324 = vcmp.lt.f32.partialorder %v308, -100.0
  %vm325 = vcmp.lt.f32.partialorder %v309, -100.0
  %vm326 = vcmp.lt.f32.partialorder %v310, -100.0
  %vm327 = vcmp.lt.f32.partialorder %v311, -100.0
  %v328 = vsel %vm312, -100.0, %v296
  %v329 = vsel %vm313, -100.0, %v297
  %v330 = vsel %vm314, -100.0, %v298
  %v331 = vsel %vm315, -100.0, %v299
  %v332 = vsel %vm316, -100.0, %v300
  %v333 = vsel %vm317, -100.0, %v301
  %v334 = vsel %vm318, -100.0, %v302
  %v335 = vsel %vm319, -100.0, %v303
  %v336 = vsel %vm320, -100.0, %v304
  %v337 = vsel %vm321, -100.0, %v305
  %v338 = vsel %vm322, -100.0, %v306
  %v339 = vsel %vm323, -100.0, %v307
  %v340 = vsel %vm324, -100.0, %v308
  %v341 = vsel %vm325, -100.0, %v309
  %v342 = vsel %vm326, -100.0, %v310
  %v343 = vsel %vm327, -100.0, %v311
  %vm344 = vcmp.gt.f32.partialorder %v328, 40.0
  %vm345 = vcmp.gt.f32.partialorder %v329, 40.0
  %vm346 = vcmp.gt.f32.partialorder %v330, 40.0
  %vm347 = vcmp.gt.f32.partialorder %v331, 40.0
  %vm348 = vcmp.gt.f32.partialorder %v332, 40.0
  %vm349 = vcmp.gt.f32.partialorder %v333, 40.0
  %vm350 = vcmp.gt.f32.partialorder %v334, 40.0
  %vm351 = vcmp.gt.f32.partialorder %v335, 40.0
  %vm352 = vcmp.gt.f32.partialorder %v336, 40.0
  %vm353 = vcmp.gt.f32.partialorder %v337, 40.0
  %vm354 = vcmp.gt.f32.partialorder %v338, 40.0
  %vm355 = vcmp.gt.f32.partialorder %v339, 40.0
  %vm356 = vcmp.gt.f32.partialorder %v340, 40.0
  %vm357 = vcmp.gt.f32.partialorder %v341, 40.0
  %vm358 = vcmp.gt.f32.partialorder %v342, 40.0
  %vm359 = vcmp.gt.f32.partialorder %v343, 40.0
  %v360 = vsel %vm344, 40.0, %v328
  %v361 = vsel %vm345, 40.0, %v329
  %v362 = vsel %vm346, 40.0, %v330
  %v363 = vsel %vm347, 40.0, %v331
  %v364 = vsel %vm348, 40.0, %v332
  %v365 = vsel %vm349, 40.0, %v333
  %v366 = vsel %vm350, 40.0, %v334
  %v367 = vsel %vm351, 40.0, %v335
  %v368 = vsel %vm352, 40.0, %v336
  %v369 = vsel %vm353, 40.0, %v337
  %v370 = vsel %vm354, 40.0, %v338
  %v371 = vsel %vm355, 40.0, %v339
  %v372 = vsel %vm356, 40.0, %v340
  %v373 = vsel %vm357, 40.0, %v341
  %v374 = vsel %vm358, 40.0, %v342
  %v375 = vsel %vm359, 40.0, %v343
  %v376 = vmul.f32 %v360, 1.442695
  %v377 = vpow.pop %v376
  %v378 = vmul.f32 %v361, 1.442695
  %v379 = vpow.pop %v378
  %v380 = vmul.f32 %v362, 1.442695
  %v381 = vpow.pop %v380
  %v382 = vmul.f32 %v363, 1.442695
  %v383 = vpow.pop %v382
  %v384 = vmul.f32 %v364, 1.442695
  %v385 = vpow.pop %v384
  %v386 = vmul.f32 %v365, 1.442695
  %v387 = vpow.pop %v386
  %v388 = vmul.f32 %v366, 1.442695
  %v389 = vpow.pop %v388
  %v390 = vmul.f32 %v367, 1.442695
  %v391 = vpow.pop %v390
  %v392 = vmul.f32 %v368, 1.442695
  %v393 = vpow.pop %v392
  %v394 = vmul.f32 %v369, 1.442695
  %v395 = vpow.pop %v394
  %v396 = vmul.f32 %v370, 1.442695
  %v397 = vpow.pop %v396
  %v398 = vmul.f32 %v371, 1.442695
  %v399 = vpow.pop %v398
  %v400 = vmul.f32 %v372, 1.442695
  %v401 = vpow.pop %v400
  %v402 = vmul.f32 %v373, 1.442695
  %v403 = vpow.pop %v402
  %v404 = vmul.f32 %v374, 1.442695
  %v405 = vpow.pop %v404
  %v406 = vmul.f32 %v375, 1.442695
  %v407 = vpow.pop %v406
  %vm408 = vcmask 130048
  %409 = vst.msk [vmem:[%s6] sm:$0xff] %vm408, %v377
  %410 = vst.msk [vmem:[%s6 + $0x8] sm:$0xff] %vm408, %v379
  %411 = vst.msk [vmem:[%s6 + $0x10] sm:$0xff] %vm408, %v381
  %412 = vst.msk [vmem:[%s6 + $0x18] sm:$0xff] %vm408, %v383
  %413 = vst.msk [vmem:[%s6 + $0x20] sm:$0xff] %vm408, %v385
  %414 = vst.msk [vmem:[%s6 + $0x28] sm:$0xff] %vm408, %v387
  %415 = vst.msk [vmem:[%s6 + $0x30] sm:$0xff] %vm408, %v389
  %416 = vst.msk [vmem:[%s6 + $0x38] sm:$0xff] %vm408, %v391
  %417 = vst.msk [vmem:[%s6 + $0x40] sm:$0xff] %vm408, %v393
  %418 = vst.msk [vmem:[%s6 + $0x48] sm:$0xff] %vm408, %v395
  %419 = vst.msk [vmem:[%s6 + $0x50] sm:$0xff] %vm408, %v397
  %420 = vst.msk [vmem:[%s6 + $0x58] sm:$0xff] %vm408, %v399
  %421 = vst.msk [vmem:[%s6 + $0x60] sm:$0xff] %vm408, %v401
  %422 = vst.msk [vmem:[%s6 + $0x68] sm:$0xff] %vm408, %v403
  %423 = vst.msk [vmem:[%s6 + $0x70] sm:$0xff] %vm408, %v405
  %424 = vst.msk [vmem:[%s6 + $0x78] sm:$0xff] %vm408, %v407
  %v425 = vld [vmem:[%s4] sm:$0x1]
  %v427 = vperm.slane %v425, 0
  %v429 = vmul.f32 %v377, %v427
  %v430 = vmul.f32 %v379, %v427
  %v431 = vmul.f32 %v381, %v427
  %v432 = vmul.f32 %v383, %v427
  %v433 = vmul.f32 %v385, %v427
  %v434 = vmul.f32 %v387, %v427
  %v435 = vmul.f32 %v389, %v427
  %v436 = vmul.f32 %v391, %v427
  %v437 = vmul.f32 %v393, %v427
  %v438 = vmul.f32 %v395, %v427
  %v439 = vmul.f32 %v397, %v427
  %v440 = vmul.f32 %v399, %v427
  %v441 = vmul.f32 %v401, %v427
  %v442 = vmul.f32 %v403, %v427
  %v443 = vmul.f32 %v405, %v427
  %v444 = vmul.f32 %v407, %v427
  %v445 = vsel %vm408, %v429, 0.0
  %446 = vadd.xlane.f32.xlu0 %v445
  %v447 = vpop.xlane.xlu0 %446
  %v448 = vsel %vm408, %v430, 0.0
  %449 = vadd.xlane.f32.xlu0 %v448
  %v450 = vpop.xlane.xlu0 %449
  %v451 = vsel %vm408, %v431, 0.0
  %452 = vadd.xlane.f32.xlu0 %v451
  %v453 = vpop.xlane.xlu0 %452
  %v454 = vsel %vm408, %v432, 0.0
  %455 = vadd.xlane.f32.xlu0 %v454
  %v456 = vpop.xlane.xlu0 %455
  %v457 = vsel %vm408, %v433, 0.0
  %458 = vadd.xlane.f32.xlu0 %v457
  %v459 = vpop.xlane.xlu0 %458
  %v460 = vsel %vm408, %v434, 0.0
  %461 = vadd.xlane.f32.xlu0 %v460
  %v462 = vpop.xlane.xlu0 %461
  %v463 = vsel %vm408, %v435, 0.0
  %464 = vadd.xlane.f32.xlu0 %v463
  %v465 = vpop.xlane.xlu0 %464
  %v466 = vsel %vm408, %v436, 0.0
  %467 = vadd.xlane.f32.xlu0 %v466
  %v468 = vpop.xlane.xlu0 %467
  %v469 = vsel %vm408, %v437, 0.0
  %470 = vadd.xlane.f32.xlu0 %v469
  %v471 = vpop.xlane.xlu0 %470
  %v472 = vsel %vm408, %v438, 0.0
  %473 = vadd.xlane.f32.xlu0 %v472
  %v474 = vpop.xlane.xlu0 %473
  %v475 = vsel %vm408, %v439, 0.0
  %476 = vadd.xlane.f32.xlu0 %v475
  %v477 = vpop.xlane.xlu0 %476
  %v478 = vsel %vm408, %v440, 0.0
  %479 = vadd.xlane.f32.xlu0 %v478
  %v480 = vpop.xlane.xlu0 %479
  %v481 = vsel %vm408, %v441, 0.0
  %482 = vadd.xlane.f32.xlu0 %v481
  %v483 = vpop.xlane.xlu0 %482
  %v484 = vsel %vm408, %v442, 0.0
  %485 = vadd.xlane.f32.xlu0 %v484
  %v486 = vpop.xlane.xlu0 %485
  %v487 = vsel %vm408, %v443, 0.0
  %488 = vadd.xlane.f32.xlu0 %v487
  %v489 = vpop.xlane.xlu0 %488
  %v490 = vsel %vm408, %v444, 0.0
  %491 = vadd.xlane.f32.xlu0 %v490
  %v492 = vpop.xlane.xlu0 %491
  %v493 = vmul.f32 %v447, 0.6666667
  %v494 = vmul.f32 %v450, 0.6666667
  %v495 = vmul.f32 %v453, 0.6666667
  %v496 = vmul.f32 %v456, 0.6666667
  %v497 = vmul.f32 %v459, 0.6666667
  %v498 = vmul.f32 %v462, 0.6666667
  %v499 = vmul.f32 %v465, 0.6666667
  %v500 = vmul.f32 %v468, 0.6666667
  %v501 = vmul.f32 %v471, 0.6666667
  %v502 = vmul.f32 %v474, 0.6666667
  %v503 = vmul.f32 %v477, 0.6666667
  %v504 = vmul.f32 %v480, 0.6666667
  %v505 = vmul.f32 %v483, 0.6666667
  %v506 = vmul.f32 %v486, 0.6666667
  %v507 = vmul.f32 %v489, 0.6666667
  %v508 = vmul.f32 %v492, 0.6666667
  %v509 = vtanh.pop %v493
  %v510 = vtanh.pop %v494
  %v511 = vtanh.pop %v495
  %v512 = vtanh.pop %v496
  %v513 = vtanh.pop %v497
  %v514 = vtanh.pop %v498
  %v515 = vtanh.pop %v499
  %v516 = vtanh.pop %v500
  %v517 = vtanh.pop %v501
  %v518 = vtanh.pop %v502
  %v519 = vtanh.pop %v503
  %v520 = vtanh.pop %v504
  %v521 = vtanh.pop %v505
  %v522 = vtanh.pop %v506
  %v523 = vtanh.pop %v507
  %v524 = vtanh.pop %v508
  %v525 = vmul.f32 %v509, 1.7159
  %v526 = vmul.f32 %v510, 1.7159
  %v527 = vmul.f32 %v511, 1.7159
  %v528 = vmul.f32 %v512, 1.7159
  %v529 = vmul.f32 %v513, 1.7159
  %v530 = vmul.f32 %v514, 1.7159
  %v531 = vmul.f32 %v515, 1.7159
  %v532 = vmul.f32 %v516, 1.7159
  %v533 = vmul.f32 %v517, 1.7159
  %v534 = vmul.f32 %v518, 1.7159
  %v535 = vmul.f32 %v519, 1.7159
  %v536 = vmul.f32 %v520, 1.7159
  %v537 = vmul.f32 %v521, 1.7159
  %v538 = vmul.f32 %v522, 1.7159
  %v539 = vmul.f32 %v523, 1.7159
  %v540 = vmul.f32 %v524, 1.7159
  %vm541 = vcmask 7168
  %542 = vst.msk [vmem:[%s5] sm:$0xff] %vm541, %v525
  %543 = vst.msk [vmem:[%s5 + $0x8] sm:$0xff] %vm541, %v526
  %544 = vst.msk [vmem:[%s5 + $0x10] sm:$0xff] %vm541, %v527
  %545 = vst.msk [vmem:[%s5 + $0x18] sm:$0xff] %vm541, %v528
  %546 = vst.msk [vmem:[%s5 + $0x20] sm:$0xff] %vm541, %v529
  %547 = vst.msk [vmem:[%s5 + $0x28] sm:$0xff] %vm541, %v530
  %548 = vst.msk [vmem:[%s5 + $0x30] sm:$0xff] %vm541, %v531
  %549 = vst.msk [vmem:[%s5 + $0x38] sm:$0xff] %vm541, %v532
  %550 = vst.msk [vmem:[%s5 + $0x40] sm:$0xff] %vm541, %v533
  %551 = vst.msk [vmem:[%s5 + $0x48] sm:$0xff] %vm541, %v534
  %552 = vst.msk [vmem:[%s5 + $0x50] sm:$0xff] %vm541, %v535
  %553 = vst.msk [vmem:[%s5 + $0x58] sm:$0xff] %vm541, %v536
  %554 = vst.msk [vmem:[%s5 + $0x60] sm:$0xff] %vm541, %v537
  %555 = vst.msk [vmem:[%s5 + $0x68] sm:$0xff] %vm541, %v538
  %556 = vst.msk [vmem:[%s5 + $0x70] sm:$0xff] %vm541, %v539
  %557 = vst.msk [vmem:[%s5 + $0x78] sm:$0xff] %vm541, %v540
  // Predicated region
  $region22: #{rbfdd_forward.1} parent=0 // pred_check
    _
  $region23: #{rbfdd_forward.1} parent=0 // pred_check_branch
    %559 = sbr.rel (0) target = $region25
  $region24: #{rbfdd_forward.1} parent=0 // pred_region
    _
  $region25: #{rbfdd_forward.1} parent=0 // pred_fallthru
    _
  // Predicated region
  $region26: #{rbfdd_forward.1} parent=0 // pred_check
    _
  $region27: #{rbfdd_forward.1} parent=0 // pred_check_branch
    %561 = sbr.rel (0) target = $region29
  $region28: #{rbfdd_forward.1} parent=0 // pred_region
    _
  $region29: #{rbfdd_forward.1} parent=0 // pred_fallthru
    _
  // Predicated region
  $region30: #{rbfdd_forward.1} parent=0 // pred_check
    _
  $region31: #{rbfdd_forward.1} parent=0 // pred_check_branch
    %563 = sbr.rel (0) target = $region33
  $region32: #{rbfdd_forward.1} parent=0 // pred_region
    _
  $region33: #{rbfdd_forward.1} parent=0 // pred_fallthru
    _
  // Predicated region
  $region34: #{rbfdd_forward.1} parent=0 // pred_check
    _
  $region35: #{rbfdd_forward.1} parent=0 // pred_check_branch
    %565 = sbr.rel (0) target = $region37
  $region36: #{rbfdd_forward.1} parent=0 // pred_region
    _
  $region37: #{rbfdd_forward.1} parent=0 // pred_fallthru
    _

</llo_original>
